<compile_context>
chip_gen: v6e
topology: v6e:2x2x1
jax: 0.10.0
libtpu: 0.0.40
codegen_flags: <defaults>
</compile_context>

<pallas_src>
import math

import jax
import jax.numpy as jnp
from jax.experimental import pallas as pl
from jax.experimental.pallas import tpu as pltpu


# Below this many elements, a fused XLA elementwise add beats a kernel launch.
_PALLAS_MIN_ELEMS = 1 << 15
# Tile-sizing budget: ~2 double-buffered input tiles + 2 output tiles.
_VMEM_BUDGET_BYTES = 20 * 1024 * 1024
# Explicit scoped-VMEM limit (raises v5e's 16 MiB default; safe on v6e/v7x).
_VMEM_LIMIT_BYTES = 32 * 1024 * 1024


def _pos_enc_add_kernel(x_ref, pe_ref, o_ref):
    # x_ref:  (TM, TL) tile of the flattened input for this grid step.
    # pe_ref: (1,  TL) positional-encoding row slice (broadcasts over rows).
    # o_ref:  (TM, TL) output tile.
    o_ref[...] = x_ref[...] + pe_ref[...]


def make_pe(embed_dim: int, max_len: int = 3, dtype=jnp.float32) -> jnp.ndarray:
    """Sinusoidal positional-encoding buffer, shape (1, max_len, embed_dim).

    Matches the PyTorch module (sin on even columns, cos on odd columns).
    Assumes even embed_dim, same as the original module.
    """
    position = jnp.arange(max_len, dtype=jnp.float32)[:, None]               # (max_len, 1)
    div_term = jnp.exp(
        jnp.arange(0, embed_dim, 2, dtype=jnp.float32)
        * (-math.log(10000.0) / embed_dim)
    )                                                                         # (embed_dim//2,)
    angles = position * div_term                                              # (max_len, embed_dim//2)
    pe = jnp.zeros((max_len, embed_dim), dtype=jnp.float32)
    pe = pe.at[:, 0::2].set(jnp.sin(angles))
    pe = pe.at[:, 1::2].set(jnp.cos(angles))
    return pe[None].astype(dtype)                                             # (1, max_len, embed_dim)


def _choose_tiles(n_rows: int, lane: int, itemsize: int,
                  max_rows_per_block: int, lane_block: int | None):
    """Pick (row_tile, lane_tile) that fits ~2 in + 2 out buffers in budget."""
    # --- lane tile ---
    if lane_block is not None and lane_block < lane:
        # Partial lane tiles must be multiples of 128 (layout rule).
        tl = max(128, (lane_block // 128) * 128)
    else:
        tl = lane
        # Only split the lane axis when even an 8-row tile of the full lane
        # would blow the budget.
        if 4 * 8 * lane * itemsize > _VMEM_BUDGET_BYTES and lane > 128:
            cand = _VMEM_BUDGET_BYTES // (4 * 8 * itemsize)
            tl = max(128, (cand // 128) * 128)
    tl = min(tl, lane)

    # --- row tile: largest multiple of 8 within budget (or the full dim) ---
    tm = _VMEM_BUDGET_BYTES // max(1, 4 * tl * itemsize)
    tm = max(8, min(max_rows_per_block, (tm // 8) * 8))
    if n_rows <= tm:
        tm = n_rows
    return tm, tl


def positional_encoding_forward(
    inp: jnp.ndarray,
    pe: jnp.ndarray,
    *,
    use_pallas: bool | None = None,
    donate: bool = False,
    max_rows_per_block: int = 1024,
    lane_block: int | None = None,
) -> jnp.ndarray:
    """inp: (B, S, E) with S <= max_len; returns inp + pe[:, :S]."""
    B, S, E = inp.shape
    pe_slice = pe[:, :S, :].astype(inp.dtype)                 # (1, S, E), static slice

    if use_pallas is None:
        use_pallas = inp.size >= _PALLAS_MIN_ELEMS
    if not use_pallas:
        # Tiny problem: plain XLA fused add is strictly faster than a kernel launch.
        return inp + pe_slice

    # --- lane-dense 2-D slab: one row per batch element, last dim = S*E ---
    lane = S * E
    x2d = inp.reshape(B, lane)
    pe_row = pe_slice.reshape(1, lane)

    tm, tl = _choose_tiles(B, lane, x2d.dtype.itemsize, max_rows_per_block, lane_block)
    grid = (pl.cdiv(B, tm), pl.cdiv(lane, tl))

    call_kwargs = {}
    if donate:
        # Only worthwhile when the caller no longer needs `inp`
        # (otherwise XLA inserts a defensive copy).
        call_kwargs["input_output_aliases"] = {0: 0}

    out2d = pl.pallas_call(
        _pos_enc_add_kernel,
        out_shape=jax.ShapeDtypeStruct((B, lane), inp.dtype),
        grid_spec=pltpu.PrefetchScalarGridSpec(
            num_scalar_prefetch=0,
            grid=grid,
            in_specs=[
                # Input tile marches over (rows, lanes); ragged last blocks are
                # masked by Pallas (no wrapper-side padding copy).
                pl.BlockSpec((tm, tl), lambda i, j: (i, j)),
                # pe row: only the lane index moves; row index pinned.
                pl.BlockSpec((1, tl), lambda i, j: (0, j)),
            ],
            out_specs=pl.BlockSpec((tm, tl), lambda i, j: (i, j)),
        ),
        compiler_params=pltpu.CompilerParams(
            dimension_semantics=("parallel", "parallel"),
            vmem_limit_bytes=_VMEM_LIMIT_BYTES,
        ),
        **call_kwargs,
    )(x2d, pe_row)

    return out2d.reshape(B, S, E)


if __name__ == "__main__":
    key = jax.random.PRNGKey(0)
    k1, k2, k3 = jax.random.split(key, 3)

    # --- Case 1: module defaults (embed_dim=32, max_len=3), tiny input.
    embed_dim, max_len = 32, 3
    batch, seq_len = 2, 3
    x1 = jax.random.normal(k1, (batch, seq_len, embed_dim), dtype=jnp.float32)
    pe1 = make_pe(embed_dim, max_len=max_len)

    out1 = positional_encoding_forward(x1, pe1, use_pallas=True)  # force kernel path
    out1 = jax.block_until_ready(out1)
    ref1 = x1 + pe1[:, :seq_len]
    assert out1.shape == (batch, seq_len, embed_dim)
    assert jnp.allclose(out1, ref1, atol=1e-6), "case 1 mismatch vs reference"

    # Auto-dispatch path (falls back to plain XLA at this size) must also match.
    out1_auto = jax.block_until_ready(positional_encoding_forward(x1, pe1))
    assert jnp.allclose(out1_auto, ref1, atol=1e-6), "case 1 (auto) mismatch"

    # --- Case 2: ragged row blocks without wrapper padding
    #     (B=50, TM=16 -> 4 row blocks, last one masked by Pallas).
    embed_dim2, batch2, seq_len2 = 128, 50, 3
    x2 = jax.random.normal(k2, (batch2, seq_len2, embed_dim2), dtype=jnp.float32)
    pe2 = make_pe(embed_dim2, max_len=3)

    out2 = positional_encoding_forward(
        x2, pe2, use_pallas=True, max_rows_per_block=16
    )
    out2 = jax.block_until_ready(out2)
    ref2 = x2 + pe2[:, :seq_len2]
    assert out2.shape == (batch2, seq_len2, embed_dim2)
    assert jnp.allclose(out2, ref2, atol=1e-6), "case 2 mismatch vs reference"

    # --- Case 3: 2-D grid with a ragged lane block
    #     (lane = 3*256 = 768, lane_block=512 -> 2 lane blocks, last one masked).
    embed_dim3, batch3, seq_len3 = 256, 16, 3
    x3 = jax.random.normal(k3, (batch3, seq_len3, embed_dim3), dtype=jnp.float32)
    pe3 = make_pe(embed_dim3, max_len=3)

    out3 = positional_encoding_forward(
        x3, pe3, use_pallas=True, lane_block=512
    )
    out3 = jax.block_until_ready(out3)
    ref3 = x3 + pe3[:, :seq_len3]
    assert out3.shape == (batch3, seq_len3, embed_dim3)
    assert jnp.allclose(out3, ref3, atol=1e-6), "case 3 mismatch vs reference"

    print("KERNEL_OK")
</pallas_src>

<mosaic_0001>
module attributes {stable_mosaic.version = 11 : i64} {
  func.func @_pos_enc_add_kernel(%arg0: i32, %arg1: i32, %arg2: memref<2x96xf32, #tpu.memory_space<vmem>>, %arg3: memref<1x96xf32, #tpu.memory_space<vmem>>, %arg4: memref<2x96xf32, #tpu.memory_space<vmem>>) attributes {dimension_semantics = [#tpu.dimension_semantics<parallel>, #tpu.dimension_semantics<parallel>], iteration_bounds = array<i64: 1, 1>, scalar_prefetch = 0 : i64, scratch_operands = 0 : i64, tpu.core_type = #tpu.core_type<tc>, window_params = [{transform_indices = @transform_0, window_bounds = array<i64: 2, 96>}, {transform_indices = @transform_1, window_bounds = array<i64: 1, 96>}, {transform_indices = @transform_2, window_bounds = array<i64: 2, 96>}]} {
    %c0 = arith.constant 0 : index
    %c0_0 = arith.constant 0 : index
    %0 = vector.load %arg2[%c0, %c0_0] : memref<2x96xf32, #tpu.memory_space<vmem>>, vector<2x96xf32>
    %c0_1 = arith.constant 0 : index
    %c0_2 = arith.constant 0 : index
    %1 = vector.load %arg3[%c0_1, %c0_2] : memref<1x96xf32, #tpu.memory_space<vmem>>, vector<1x96xf32>
    %2 = vector.broadcast %1 : vector<1x96xf32> to vector<2x96xf32>
    %3 = arith.addf %0, %2 : vector<2x96xf32>
    %c0_3 = arith.constant 0 : index
    %c0_4 = arith.constant 0 : index
    %4 = vector.load %arg4[%c0_3, %c0_4] : memref<2x96xf32, #tpu.memory_space<vmem>>, vector<2x96xf32>
    tpu.vector_store %arg4[%c0_3, %c0_4], %3 {strides = array<i32>} : memref<2x96xf32, #tpu.memory_space<vmem>>, vector<2x96xf32>,
    return
  }
  func.func @transform_0(%arg0: i32, %arg1: i32) -> (i32, i32) {
    %c0_i32 = arith.constant 0 : i32
    return %arg0, %arg1 : i32, i32
  }
  func.func @transform_1(%arg0: i32, %arg1: i32) -> (i32, i32) {
    %c0_i32 = arith.constant 0 : i32
    %c0_i32_0 = arith.constant 0 : i32
    return %c0_i32, %arg1 : i32, i32
  }
  func.func @transform_2(%arg0: i32, %arg1: i32) -> (i32, i32) {
    %c0_i32 = arith.constant 0 : i32
    return %arg0, %arg1 : i32, i32
  }
}

</mosaic_0001>

<llo_original>
// kernel: tpu_custom_call.1
$region0: #{tpu_custom_call.1}
  #allocation0 [shape = 'u32[]', space=smem, size = 0x4, offset = 0x4, fixed_abs, tag = 'smem constant byte address 0x4 - core index']
  #allocation1 [shape = 'u32[144,128]{1,0:T(1,128)}', space=vmem, size = 0x12000, scoped, tag = 'internal scratch']
  %s0 = inlined_call_operand.hbm [shape: f32[2,96], index: 0, kind: input, shape index: {}]
  %s1 = inlined_call_operand.vmem [shape: f32[1,96], index: 1, kind: input, shape index: {}]
  %s2 = inlined_call_operand.hbm [shape: f32[2,96], index: 2, kind: output, shape index: {}]
  %s3 = sld [smem:[#allocation0]]
  $region22: #{tpu_custom_call.1} parent=0
    _
  %s5 = ssub.s32 1, %s3
  %s6 = scalar_select 0, %s5, %s3
  $region1: #{tpu_custom_call.1} parent=0
    #allocation2 [shape = 'u8[1024]{0}', space=vmem, size = 0x400, scoped, tag = 'input window, operand 0, single buffered']
    #allocation3 [shape = 's32[1]{0}', space=sflag, size = 0x4, scoped, tag = 'scoped memory for tpu_custom_call.1']
    #allocation4 [shape = 's32[1]{0}', space=sflag, size = 0x4, scoped, tag = 'scoped memory for tpu_custom_call.1']
    #allocation5 [shape = 'u8[1024]{0}', space=vmem, size = 0x400, scoped, tag = 'output window, operand 0, single buffered']
    %7 = vsyncpa [#allocation3], 0
    %8 = vsyncpa [#allocation4], 0
    // Predicated region
    $region2: #{tpu_custom_call.1} parent=1 // pred_check
      _
    $region3: #{tpu_custom_call.1} parent=1 // pred_check_branch
      %10 = sbr.rel (0) target = $region5
    $region4: #{tpu_custom_call.1} parent=1 // pred_region
      %s12 = ssub.s32 32, 32
      %13 = vsyncadd [#allocation3], %s12
      %s15 = sshll.u32 [#allocation2], 4
      %s16 = int_to_ptr.vmem [resolvable:$true] %s15
      %18 = dma.hbm_to_vmem [thread:$0]  %s0, 32, %s16, [#allocation3]
    $region5: #{tpu_custom_call.1} parent=1 // pred_fallthru
      _
    // Predicated region
    $region6: #{tpu_custom_call.1} parent=1 // pred_check
      _
    $region7: #{tpu_custom_call.1} parent=1 // pred_check_branch
      %20 = sbr.rel (0) target = $region9
    $region8: #{tpu_custom_call.1} parent=1 // pred_region
      _
    $region9: #{tpu_custom_call.1} parent=1 // pred_fallthru
      _
    // Predicated region
    $region10: #{tpu_custom_call.1} parent=1 // pred_check
      _
    $region11: #{tpu_custom_call.1} parent=1 // pred_check_branch
      %22 = sbr.rel (0) target = $region13
    $region12: #{tpu_custom_call.1} parent=1 // pred_region
      %23 = dma.done [#allocation3], 32
    $region13: #{tpu_custom_call.1} parent=1 // pred_fallthru
      _
    %v24 = vld [vmem:[#allocation2] sm:$0x3]
    %v25 = vld [vmem:[%s1] sm:$0x1]
    %v27 = vlaneseq
    %v28 = vshrl.u32 %v27, 7
    %v29 = vsub.s32 0, %v28
    %v30 = vrot.slane %v25, %v29
    %v32 = vadd.f32 %v24, %v30
    %vm33 = vcmask 779264
    %34 = vst.msk [vmem:[#allocation5] sm:$0x3] %vm33, %v32
    // Predicated region
    $region14: #{tpu_custom_call.1} parent=1 // pred_check
      _
    $region15: #{tpu_custom_call.1} parent=1 // pred_check_branch
      %36 = sbr.rel (0) target = $region17
    $region16: #{tpu_custom_call.1} parent=1 // pred_region
      %s38 = ssub.s32 32, 32
      %39 = vsyncadd [#allocation4], %s38
      %s41 = sshll.u32 [#allocation5], 4
      %s42 = int_to_ptr.vmem [resolvable:$true] %s41
      %44 = dma.vmem_to_hbm [thread:$0]  %s42, 32, %s2, [#allocation4]
    $region17: #{tpu_custom_call.1} parent=1 // pred_fallthru
      _
    // Predicated region
    $region18: #{tpu_custom_call.1} parent=1 // pred_check
      _
    $region19: #{tpu_custom_call.1} parent=1 // pred_check_branch
      %46 = sbr.rel (0) target = $region21
    $region20: #{tpu_custom_call.1} parent=1 // pred_region
      %47 = dma.done [#allocation4], 32
    $region21: #{tpu_custom_call.1} parent=1 // pred_fallthru
      _
    %48 = vsyncpa [#allocation3], 1
    %49 = vsyncpa [#allocation4], 1

</llo_original>
